<compile_context>
chip_gen: v6e
topology: v6e:2x2x1
jax: 0.10.0
libtpu: 0.0.40
codegen_flags: <defaults>
</compile_context>

<pallas_src>
import jax
import jax.numpy as jnp
from jax import lax
from jax.experimental import pallas as pl
from jax.experimental.pallas import tpu as pltpu


def _layer_norm(x, gamma, beta, eps=1e-5):
    # x: (T, D), gamma/beta: (1, D); biased variance, eps like torch.nn.LayerNorm.
    mu = jnp.mean(x, axis=-1, keepdims=True)
    xc = x - mu
    var = jnp.mean(xc * xc, axis=-1, keepdims=True)
    return xc * lax.rsqrt(var + eps) * gamma + beta


def qkv_proj_kernel(x_ref, w_ref, qkv_ref):
    # x is cast to bf16 exactly once per token here (not per attention tile);
    # f32 MXU accumulation, Q|K|V stored bf16 for the attention kernel.
    x_bf = x_ref[0].astype(jnp.bfloat16)
    qkv = jnp.dot(x_bf, w_ref[...], preferred_element_type=jnp.float32)
    qkv_ref[0] = qkv.astype(qkv_ref.dtype)


def encoder_block_kernel(x_ref, q_ref, k_ref, v_ref,
                         wh_ref, bh_ref, ln1_g_ref, ln1_b_ref,
                         w1_ref, b1_ref, w2_ref, b2_ref,
                         ln2_g_ref, ln2_b_ref, o_ref):
    ts, d = x_ref.shape[1], x_ref.shape[2]
    n_heads, dk = q_ref.shape[1], q_ref.shape[3]
    scale = 1.0 / (dk ** 0.5)

    x_tile = x_ref[0]            # (TS, D)      f32  residual / LayerNorm path
    q = q_ref[0]                 # (H, TS, dk)  bf16
    k = k_ref[0]                 # (H, S,  dk)  bf16 (precomputed, reused across tiles)
    v = v_ref[0]                 # (H, S,  dk)  bf16

    # ---- multi-head self-attention: one head-batched dot_general (no per-head
    # lane slicing, no concatenate); f32 scores, exact softmax ----
    s = jnp.einsum("hqd,hkd->hqk", q, k,
                   preferred_element_type=jnp.float32) * scale      # (H, TS, S)
    s = s - jnp.max(s, axis=-1, keepdims=True)
    p = jnp.exp(s)
    a = p * pl.reciprocal(jnp.sum(p, axis=-1, keepdims=True), approx=False)
    ctx = jnp.einsum("hqk,hkd->hqd", a.astype(jnp.bfloat16), v,
                     preferred_element_type=jnp.float32)            # (H, TS, dk)
    # TODO(synk): for very long S (>~4K) switch this section to a KV-blocked
    # online-softmax (flash-style) loop so VMEM stays bounded independent of S.

    # Output projection: concat_h(ctx_h) @ Wh  ==  sum_h ctx_h @ Wh[h]
    # (leading-dim slices only; avoids an in-kernel head transpose/concatenate).
    ctx_bf = ctx.astype(jnp.bfloat16)
    attn = jnp.zeros((ts, d), jnp.float32)
    for h in range(n_heads):
        attn = attn + jnp.dot(ctx_bf[h], wh_ref[h],
                              preferred_element_type=jnp.float32)
    attn = attn + bh_ref[...]

    # TODO(synk): nn.Dropout(0.1) is stochastic in training mode; identity here (eval).
    h1 = _layer_norm(x_tile + attn, ln1_g_ref[...], ln1_b_ref[...])

    # ---- position-wise FFN ----
    f = jnp.dot(h1.astype(jnp.bfloat16), w1_ref[...],
                preferred_element_type=jnp.float32) + b1_ref[...]
    f = jax.nn.gelu(f, approximate=False)        # exact erf GELU == torch nn.GELU()
    f = jnp.dot(f.astype(jnp.bfloat16), w2_ref[...],
                preferred_element_type=jnp.float32) + b2_ref[...]
    # TODO(synk): second dropout likewise identity (eval mode).
    out = _layer_norm(h1 + f, ln2_g_ref[...], ln2_b_ref[...])

    o_ref[0] = out.astype(o_ref.dtype)


def _vmem_cap_bytes():
    try:
        return int(pltpu.get_tpu_info().vmem_capacity_bytes)
    except Exception:
        return 64 * 1024 * 1024          # conservative fallback (v7x per-core VMEM)


def _vmem_limit(est_bytes, cap_bytes):
    want = max(32 << 20, int(est_bytes * 1.4))       # headroom over estimate
    return int(min(cap_bytes - (2 << 20), want))


def _pick_tile_s(S, vmem_cap):
    # Largest tile dividing S; cap at 512 on 64 MiB chips (v7x), allow 1024 on
    # 128 MiB chips (v5e/v6e). Small S runs as a single tile per batch element.
    max_t = 1024 if vmem_cap >= (96 << 20) else 512
    for t in (1024, 512, 256, 128):
        if t <= max_t and S >= t and S % t == 0:
            return t
    return S


def pack_layer_params(p, n_heads):
    """One-time conversion of f32 torch-layout params to kernel layout (bf16, fused Q|K|V)."""
    bf16 = jnp.bfloat16
    d = p["wq"].shape[0]
    dk = d // n_heads
    return dict(
        w_qkv=jnp.concatenate([p["wq"], p["wk"], p["wv"]], axis=1).astype(bf16),
        # (D, D) output projection stored as per-head (H, dk, D) row blocks.
        wh=p["wh"].reshape(n_heads, dk, d).astype(bf16),
        bh=p["bh"],
        ln1_g=p["ln1_g"], ln1_b=p["ln1_b"],
        w1=p["w1"].astype(bf16), b1=p["b1"],
        w2=p["w2"].astype(bf16), b2=p["b2"],
        ln2_g=p["ln2_g"], ln2_b=p["ln2_b"],
    )


def encoder_block(x, kp, n_heads, tile_s=None):
    B, S, D = x.shape
    assert D % n_heads == 0, "d_model must be divisible by n_heads"
    dk = D // n_heads
    cap = _vmem_cap_bytes()
    if tile_s is None:
        tile_s = _pick_tile_s(S, cap)
    assert S % tile_s == 0
    n_tiles = S // tile_s

    # Constant-index inputs (weights/biases/LN params): single-buffered —
    # a second pipeline buffer would never be used.
    const = dict(pipeline_mode=pl.Buffered(1))
    vec_spec = pl.BlockSpec((1, D), lambda b, s: (0, 0), **const)

    # ---- kernel 1: fused Q|K|V projection, computed once per token ----
    est1 = (2 * tile_s * D * 4            # x tile (double-buffered)
            + D * 3 * D * 2               # fused weight (single-buffered)
            + 2 * tile_s * 3 * D * 2      # qkv output tile (double-buffered)
            + tile_s * 3 * D * 4)         # f32 accumulator
    qkv = pl.pallas_call(
        qkv_proj_kernel,
        out_shape=jax.ShapeDtypeStruct((B, S, 3 * D), jnp.bfloat16),
        grid=(B, n_tiles),
        in_specs=[
            pl.BlockSpec((1, tile_s, D), lambda b, s: (b, s, 0)),
            pl.BlockSpec((D, 3 * D), lambda b, s: (0, 0), **const),
        ],
        out_specs=pl.BlockSpec((1, tile_s, 3 * D), lambda b, s: (b, s, 0)),
        compiler_params=pltpu.CompilerParams(
            dimension_semantics=("parallel", "parallel"),
            vmem_limit_bytes=_vmem_limit(est1, cap)),
    )(x, kp["w_qkv"])

    # Head split done once per layer in XLA (cheap full-array transpose) so the
    # attention kernel gets head-major bf16 blocks with no in-kernel relayout.
    def split_heads(t):
        return t.reshape(B, S, n_heads, dk).transpose(0, 2, 1, 3)

    q = split_heads(qkv[..., :D])
    k = split_heads(qkv[..., D:2 * D])
    v = split_heads(qkv[..., 2 * D:])

    # ---- kernel 2: attention + output proj + LN1 + FFN + LN2, per sequence tile ----
    est2 = (4 * tile_s * D * 4              # x tile + out tile (double-buffered)
            + 2 * tile_s * D * 2            # q tile (double-buffered)
            + 4 * S * D * 2                 # K and V full-seq bf16 (double-buffered)
            + 3 * D * D * 2                 # wh, w1, w2 (single-buffered)
            + 2 * n_heads * tile_s * S * 4  # scores + probs
            + 3 * tile_s * D * 4)           # ctx / attn / ffn intermediates
    out = pl.pallas_call(
        encoder_block_kernel,
        out_shape=jax.ShapeDtypeStruct((B, S, D), x.dtype),
        grid=(B, n_tiles),
        in_specs=[
            pl.BlockSpec((1, tile_s, D), lambda b, s: (b, s, 0)),                 # x (residual)
            pl.BlockSpec((1, n_heads, tile_s, dk), lambda b, s: (b, 0, s, 0)),    # q tile
            pl.BlockSpec((1, n_heads, S, dk), lambda b, s: (b, 0, 0, 0)),         # k full-seq
            pl.BlockSpec((1, n_heads, S, dk), lambda b, s: (b, 0, 0, 0)),         # v full-seq
            pl.BlockSpec((n_heads, dk, D), lambda b, s: (0, 0, 0), **const),      # wh
            vec_spec,                                                             # bh
            vec_spec, vec_spec,                                                   # ln1 g/b
            pl.BlockSpec((D, D), lambda b, s: (0, 0), **const), vec_spec,         # w1, b1
            pl.BlockSpec((D, D), lambda b, s: (0, 0), **const), vec_spec,         # w2, b2
            vec_spec, vec_spec,                                                   # ln2 g/b
        ],
        out_specs=pl.BlockSpec((1, tile_s, D), lambda b, s: (b, s, 0)),
        compiler_params=pltpu.CompilerParams(
            dimension_semantics=("parallel", "parallel"),
            vmem_limit_bytes=_vmem_limit(est2, cap)),
    )(x, q, k, v,
      kp["wh"], kp["bh"], kp["ln1_g"], kp["ln1_b"],
      kp["w1"], kp["b1"], kp["w2"], kp["b2"],
      kp["ln2_g"], kp["ln2_b"])
    return out


def encoder_forward(x, layer_params, n_heads):
    packed = [pack_layer_params(p, n_heads) for p in layer_params]  # converted once
    for kp in packed:
        x = encoder_block(x, kp, n_heads)
    return x


def init_encoder_params(key, d_model, n_layers):
    layers = []
    for l in range(n_layers):
        lk = jax.random.fold_in(key, l)
        ks = jax.random.split(lk, 6)
        std = 0.02
        layers.append(dict(
            wq=std * jax.random.normal(ks[0], (d_model, d_model), jnp.float32),
            wk=std * jax.random.normal(ks[1], (d_model, d_model), jnp.float32),
            wv=std * jax.random.normal(ks[2], (d_model, d_model), jnp.float32),
            wh=std * jax.random.normal(ks[3], (d_model, d_model), jnp.float32),
            bh=jnp.zeros((1, d_model), jnp.float32),
            ln1_g=jnp.ones((1, d_model), jnp.float32),
            ln1_b=jnp.zeros((1, d_model), jnp.float32),
            w1=std * jax.random.normal(ks[4], (d_model, d_model), jnp.float32),
            b1=jnp.zeros((1, d_model), jnp.float32),
            w2=std * jax.random.normal(ks[5], (d_model, d_model), jnp.float32),
            b2=jnp.zeros((1, d_model), jnp.float32),
            ln2_g=jnp.ones((1, d_model), jnp.float32),
            ln2_b=jnp.zeros((1, d_model), jnp.float32),
        ))
    return layers


if __name__ == "__main__":
    B, S, D = 2, 8, 32
    n_heads, n_layers = 4, 2

    key = jax.random.PRNGKey(0)
    kx, kp = jax.random.split(key)
    x = jax.random.normal(kx, (B, S, D), jnp.float32)
    params = init_encoder_params(kp, D, n_layers)

    out = encoder_forward(x, params, n_heads)
    out = jax.block_until_ready(out)
    assert out.shape == (B, S, D)
    assert bool(jnp.all(jnp.isfinite(out)))
    print("KERNEL_OK")
</pallas_src>

<mosaic_0001>
module attributes {stable_mosaic.version = 11 : i64} {
  func.func @qkv_proj_kernel(%arg0: i32, %arg1: i32, %arg2: memref<1x8x32xf32, #tpu.memory_space<vmem>>, %arg3: memref<32x96xbf16, #tpu.memory_space<vmem>>, %arg4: memref<1x8x96xbf16, #tpu.memory_space<vmem>>) attributes {dimension_semantics = [#tpu.dimension_semantics<parallel>, #tpu.dimension_semantics<parallel>], iteration_bounds = array<i64: 2, 1>, scalar_prefetch = 0 : i64, scratch_operands = 0 : i64, tpu.core_type = #tpu.core_type<tc>, window_params = [{transform_indices = @transform_0, window_bounds = array<i64: 1, 8, 32>}, {pipeline_mode = #tpu.pipeline_mode<synchronous>, transform_indices = @transform_1, window_bounds = array<i64: 32, 96>}, {transform_indices = @transform_2, window_bounds = array<i64: 1, 8, 96>}]} {
    %c0 = arith.constant 0 : index
    %c0_0 = arith.constant 0 : index
    %c0_1 = arith.constant 0 : index
    %0 = vector.load %arg2[%c0, %c0_0, %c0_1] : memref<1x8x32xf32, #tpu.memory_space<vmem>>, vector<1x8x32xf32>
    %1 = vector.shape_cast %0 : vector<1x8x32xf32> to vector<8x32xf32>
    %2 = arith.truncf %1 : vector<8x32xf32> to vector<8x32xbf16>
    %c0_2 = arith.constant 0 : index
    %c0_3 = arith.constant 0 : index
    %3 = vector.load %arg3[%c0_2, %c0_3] : memref<32x96xbf16, #tpu.memory_space<vmem>>, vector<32x96xbf16>
    %cst = arith.constant dense<0.000000e+00> : vector<8x96xf32>
    %4 = tpu.matmul %2, %3, %cst {dimension_numbers = #tpu.dot_dimension_numbers<[1], [0], [0], [1], [0, 0, 1, 1], [], []>} : vector<8x32xbf16>, vector<32x96xbf16>, vector<8x96xf32> -> vector<8x96xf32>
    %5 = arith.truncf %4 : vector<8x96xf32> to vector<8x96xbf16>
    %c0_4 = arith.constant 0 : index
    %c0_5 = arith.constant 0 : index
    %c0_6 = arith.constant 0 : index
    %6 = vector.load %arg4[%c0_4, %c0_5, %c0_6] : memref<1x8x96xbf16, #tpu.memory_space<vmem>>, vector<1x8x96xbf16>
    %7 = vector.shape_cast %6 : vector<1x8x96xbf16> to vector<8x96xbf16>
    %8 = vector.shape_cast %5 : vector<8x96xbf16> to vector<1x8x96xbf16>
    tpu.vector_store %arg4[%c0_4, %c0_5, %c0_6], %8 {strides = array<i32>} : memref<1x8x96xbf16, #tpu.memory_space<vmem>>, vector<1x8x96xbf16>,
    return
  }
  func.func @transform_0(%arg0: i32, %arg1: i32) -> (i32, i32, i32) {
    %c0_i32 = arith.constant 0 : i32
    %c0_i32_0 = arith.constant 0 : i32
    return %arg0, %arg1, %c0_i32 : i32, i32, i32
  }
  func.func @transform_1(%arg0: i32, %arg1: i32) -> (i32, i32) {
    %c0_i32 = arith.constant 0 : i32
    %c0_i32_0 = arith.constant 0 : i32
    %c0_i32_1 = arith.constant 0 : i32
    return %c0_i32, %c0_i32_0 : i32, i32
  }
  func.func @transform_2(%arg0: i32, %arg1: i32) -> (i32, i32, i32) {
    %c0_i32 = arith.constant 0 : i32
    %c0_i32_0 = arith.constant 0 : i32
    return %arg0, %arg1, %c0_i32 : i32, i32, i32
  }
}

</mosaic_0001>

<llo_original>
// kernel: tpu_custom_call.1
$region0: #{tpu_custom_call.1}
  #allocation0 [shape = 'u32[]', space=smem, size = 0x4, offset = 0x4, fixed_abs, tag = 'smem constant byte address 0x4 - core index']
  #allocation1 [shape = 'u32[144,128]{1,0:T(1,128)}', space=vmem, size = 0x12000, scoped, tag = 'internal scratch']
  %s0 = inlined_call_operand.hbm [shape: f32[2,8,32], index: 0, kind: input, shape index: {}]
  %s1 = inlined_call_operand.hbm [shape: bf16[32,96], index: 1, kind: input, shape index: {}]
  %s2 = inlined_call_operand.hbm [shape: bf16[2,8,96], index: 2, kind: output, shape index: {}]
  %s3 = sld [smem:[#allocation0]]
  $region49: #{tpu_custom_call.1} parent=0
    _
  %s5 = ssub.s32 1, %s3
  %s6 = scalar_select 0, %s5, %s3
  $region1: #{tpu_custom_call.1} parent=0
    #allocation2 [shape = 'u8[8192]{0}', space=vmem, size = 0x2000, scoped, tag = 'input window, operand 0']
    #allocation3 [shape = 's32[2]{0}', space=sflag, size = 0x8, scoped, tag = 'scoped memory for tpu_custom_call.1']
    #allocation4 [shape = 's32[2]{0}', space=sflag, size = 0x8, scoped, tag = 'scoped memory for tpu_custom_call.1']
    #allocation5 [shape = 'u8[8192]{0}', space=vmem, size = 0x2000, scoped, tag = 'input window, operand 1, single buffered']
    #allocation6 [shape = 's32[1]{0}', space=sflag, size = 0x4, scoped, tag = 'scoped memory for tpu_custom_call.1']
    #allocation7 [shape = 'u8[4096]{0}', space=vmem, size = 0x1000, scoped, tag = 'output window, operand 0']
    %7 = vsyncpa [#allocation3], 0
    %s8 = scalar_lea.sflag [#allocation3], 1
    %9 = vsyncpa %s8, 0
    %10 = vsyncpa [#allocation6], 0
    %11 = vsyncpa [#allocation4], 0
    %s12 = scalar_lea.sflag [#allocation4], 1
    %13 = vsyncpa %s12, 0
    loop: start=0, step=1, limit=4
    $region2: #{tpu_custom_call.1} parent=1 // loop_pre_header
      _
    $region3: #{tpu_custom_call.1} parent=1 // loop_header
      %s15 = sphi 0, %s19
      %p16 = scmp.ge.s32.totalorder %s15, 4
      %s22 = sphi 0, %s34
      %s23 = sphi 0, %s30
      %s24 = sphi 0, %s22
      %s25 = sphi 0, %s23
      %s26 = sphi 0, %s24
      %s27 = sphi 0, %s25
      %s39 = sphi 0, %s41
      %s42 = sphi 0, %s39
      %s43 = sphi 0, %s42
      %s59 = sphi 0, %s43
      %s63 = sphi 0, %s63
      %s65 = sphi 0, %s63
      %s66 = sphi 0, %s65
      %s80 = sphi 0, %s66
      %s88 = sphi 0, %s90
      %s91 = sphi 0, %s88
      %s92 = sphi 0, %s91
      %s108 = sphi 0, %s92
    $region4: #{tpu_custom_call.1} parent=1 // loop_header_branch
      %18 = sbr.rel (%p16) target = $region8
    $region5: #{tpu_custom_call.1} parent=1 // loop_body
      %s20 = ssub.s32 %s15, 1
      %s21 = ssub.s32 %s15, 2
      %s28 = sadd.s32 1, %s23
      %p29 = scmp.ge.s32.totalorder %s28, 1
      %s30 = scalar_select %p29, 0, %s28
      %s31 = sadd.s32 1, %s22
      %s32 = scalar_select %p29, %s31, %s22
      %p33 = scmp.ge.s32.totalorder %s32, 2
      %s34 = scalar_select %p33, 0, %s32
      %s35 = ssub.s32 %s22, %s34
      %s36 = ssub.s32 %s23, %s30
      %s37 = sor.u32 %s35, %s36
      %p38 = scmp.eq.s32.totalorder %s37, 0
      %s40 = sadd.s32 %s39, 1
      %s41 = scalar_select %p38, %s39, %s40
      %p44 = pneg %p38
      %p45 = scmp.eq.s32.totalorder %s15, 1
      %p46 = por %p44, %p45
      %p47 = scmp.ne.s32.totalorder %s39, %s42
      %p48 = scmp.eq.s32.totalorder %s15, 0
      %p49 = por %p47, %p48
      %p50 = scmp.ne.s32.totalorder %s39, %s42
      %p51 = scmp.eq.s32.totalorder %s20, 1
      %p52 = por %p50, %p51
      %p53 = scmp.ne.s32.totalorder %s42, %s43
      %p54 = scmp.eq.s32.totalorder %s20, 0
      %p55 = por %p53, %p54
      %p56 = scmp.ne.s32.totalorder %s42, %s43
      %p57 = scmp.eq.s32.totalorder %s21, 1
      %p58 = por %p56, %p57
      %p60 = scmp.ne.s32.totalorder %s43, %s59
      %p61 = scmp.eq.s32.totalorder %s21, 0
      %p62 = por %p60, %p61
      %s64 = sadd.s32 %s63, 1
      %p67 = scmp.eq.s32.totalorder %s15, 1
      %p68 = scmp.ne.s32.totalorder %s63, %s65
      %p69 = scmp.eq.s32.totalorder %s15, 0
      %p70 = por %p68, %p69
      %p71 = scmp.ne.s32.totalorder %s63, %s65
      %p72 = scmp.eq.s32.totalorder %s20, 1
      %p73 = por %p71, %p72
      %p74 = scmp.ne.s32.totalorder %s65, %s66
      %p75 = scmp.eq.s32.totalorder %s20, 0
      %p76 = por %p74, %p75
      %p77 = scmp.ne.s32.totalorder %s65, %s66
      %p78 = scmp.eq.s32.totalorder %s21, 1
      %p79 = por %p77, %p78
      %p81 = scmp.ne.s32.totalorder %s66, %s80
      %p82 = scmp.eq.s32.totalorder %s21, 0
      %p83 = por %p81, %p82
      %s84 = ssub.s32 %s22, %s34
      %s85 = ssub.s32 %s23, %s30
      %s86 = sor.u32 %s84, %s85
      %p87 = scmp.eq.s32.totalorder %s86, 0
      %s89 = sadd.s32 %s88, 1
      %s90 = scalar_select %p87, %s88, %s89
      %p93 = pneg %p87
      %p94 = scmp.eq.s32.totalorder %s15, 1
      %p95 = por %p93, %p94
      %p96 = scmp.ne.s32.totalorder %s88, %s91
      %p97 = scmp.eq.s32.totalorder %s15, 0
      %p98 = por %p96, %p97
      %p99 = scmp.ne.s32.totalorder %s88, %s91
      %p100 = scmp.eq.s32.totalorder %s20, 1
      %p101 = por %p99, %p100
      %p102 = scmp.ne.s32.totalorder %s91, %s92
      %p103 = scmp.eq.s32.totalorder %s20, 0
      %p104 = por %p102, %p103
      %p105 = scmp.ne.s32.totalorder %s91, %s92
      %p106 = scmp.eq.s32.totalorder %s21, 1
      %p107 = por %p105, %p106
      %p109 = scmp.ne.s32.totalorder %s92, %s108
      %p110 = scmp.eq.s32.totalorder %s21, 0
      %p111 = por %p109, %p110
      %p112 = scmp.le.s32.totalorder 1, %s15
      %p113 = scmp.lt.s32.totalorder %s15, 3
      %p114 = pnand %p112, %p113
      %p115 = pneg %p114
      // Predicated region
      $region9: #{tpu_custom_call.1} parent=5 // pred_check
        _
      $region10: #{tpu_custom_call.1} parent=5 // pred_check_branch
        %117 = sbr.rel (%p114) target = $region12
      $region11: #{tpu_custom_call.1} parent=5 // pred_region
        %s118 = ssub.s32 %s15, 1
        // Predicated region
        $region13: #{tpu_custom_call.1} parent=11 // pred_check
          %p119 = pneg %p76
        $region14: #{tpu_custom_call.1} parent=11 // pred_check_branch
          %121 = sbr.rel (%p119) target = $region16
        $region15: #{tpu_custom_call.1} parent=11 // pred_region
          %s123 = ssub.s32 256, 256
          %124 = vsyncadd [#allocation6], %s123
          %s125 = sshll.u32 [#allocation5], 4
          %s126 = int_to_ptr.vmem [resolvable:$true] %s125
          %131 = dma.hbm_to_vmem [thread:$0]  %s1, 256, %s126, [#allocation6], 64, 64, 4
        $region16: #{tpu_custom_call.1} parent=11 // pred_fallthru
          _
      $region12: #{tpu_custom_call.1} parent=5 // pred_fallthru
        _
      %p132 = scmp.lt.s32.totalorder %s15, 2
      // Predicated region
      $region17: #{tpu_custom_call.1} parent=5 // pred_check
        %p133 = pneg %p132
      $region18: #{tpu_custom_call.1} parent=5 // pred_check_branch
        %135 = sbr.rel (%p133) target = $region20
      $region19: #{tpu_custom_call.1} parent=5 // pred_region
        // Predicated region
        $region21: #{tpu_custom_call.1} parent=19 // pred_check
          %p136 = pneg %p49
        $region22: #{tpu_custom_call.1} parent=19 // pred_check_branch
          %138 = sbr.rel (%p136) target = $region24
        $region23: #{tpu_custom_call.1} parent=19 // pred_region
          %s139 = sand.u32 %s39, 1
          %s140 = scalar_lea.sflag [#allocation3], %s139
          %s141 = sand.u32 %s39, 1
          %s142 = smul.addr %s141, 8
          %s143 = scalar_lea.vmem [#allocation2], %s142
          %s145 = ssub.s32 128, 128
          %146 = vsyncadd %s140, %s145
          %s147 = sadd.s32 %s23, %s22
          %s148 = smul.addr %s147, 128
          %s149 = scalar_lea.hbm %s0, %s148
          %s151 = sshll.u32 %s143, 4
          %s152 = int_to_ptr.vmem [resolvable:$true] %s151
          %154 = dma.hbm_to_vmem [thread:$0]  %s149, 128, %s152, %s140
        $region24: #{tpu_custom_call.1} parent=19 // pred_fallthru
          _
      $region20: #{tpu_custom_call.1} parent=5 // pred_fallthru
        _
      %p155 = scmp.le.s32.totalorder 1, %s15
      %p156 = scmp.lt.s32.totalorder %s15, 3
      %p157 = pnand %p155, %p156
      %p158 = pneg %p157
      // Predicated region
      $region25: #{tpu_custom_call.1} parent=5 // pred_check
        _
      $region26: #{tpu_custom_call.1} parent=5 // pred_check_branch
        %160 = sbr.rel (%p157) target = $region28
      $region27: #{tpu_custom_call.1} parent=5 // pred_region
        %s161 = ssub.s32 %s15, 1
        %s162 = sand.u32 %s42, 1
        %s163 = scalar_lea.sflag [#allocation3], %s162
        %s164 = sand.u32 %s42, 1
        %s165 = smul.addr %s164, 8
        %s166 = scalar_lea.vmem [#allocation2], %s165
        // Predicated region
        $region29: #{tpu_custom_call.1} parent=27 // pred_check
          %p167 = pneg %p55
        $region30: #{tpu_custom_call.1} parent=27 // pred_check_branch
          %169 = sbr.rel (%p167) target = $region32
        $region31: #{tpu_custom_call.1} parent=27 // pred_region
          %170 = dma.done %s163, 128
        $region32: #{tpu_custom_call.1} parent=27 // pred_fallthru
          _
        // Predicated region
        $region33: #{tpu_custom_call.1} parent=27 // pred_check
          %p171 = pneg %p76
        $region34: #{tpu_custom_call.1} parent=27 // pred_check_branch
          %173 = sbr.rel (%p171) target = $region36
        $region35: #{tpu_custom_call.1} parent=27 // pred_region
          %174 = dma.done [#allocation6], 256
        $region36: #{tpu_custom_call.1} parent=27 // pred_fallthru
          _
        %s175 = sand.u32 %s42, 1
        %s176 = scalar_lea.sflag [#allocation3], %s175
        %s177 = sand.u32 %s42, 1
        %s178 = smul.addr %s177, 8
        %s179 = scalar_lea.vmem [#allocation2], %s178
        %p180 = pneg %p55
        %p181 = pneg %p52
        %p182 = pneg %p76
        %p183 = pneg %p73
        %p184 = pneg %p104
        %p185 = pneg %p101
        %s186 = sand.u32 %s91, 1
        %s187 = scalar_lea.sflag [#allocation4], %s186
        %s188 = sand.u32 %s91, 1
        %s189 = smul.addr %s188, 4
        %s190 = scalar_lea.vmem [#allocation7], %s189
        %v192 = vld [vmem:[%s166] sm:$0xff]
        %v193 = vpack.c.bf16 %v192, %v192
        %v194 = vld [vmem:[#allocation5] sm:$0xf]
        %v195 = vld [vmem:[#allocation5 + $0x4] sm:$0xf]
        %v196 = vld [vmem:[#allocation5 + $0x8] sm:$0xf]
        %v197 = vld [vmem:[#allocation5 + $0xc] sm:$0xf]
        %v202 = vunpack.c.l.b16 %v194
        %v203 = vunpack.c.l.b16 %v195
        %v204 = vunpack.c.l.b16 %v196
        %v205 = vunpack.c.l.b16 %v197
        %v206 = vpack.c.b16 %v203, %v202
        %v207 = vpack.c.b16 %v205, %v204
        %vm210 = vcmask 261120
        %v212 = vsel %vm210, %v193, 0
        %214 = vmatprep.subr.bf16.mxu0 0
        %215 = vmatpush1.bf16.msra.mxu0 0
        %216 = vmatprep.subr.bf16.mxu0 0
        %217 = vmatpush1.bf16.msra.mxu0 0
        %218 = vmatprep.subr.bf16.mxu0 0
        %219 = vmatpush1.bf16.msra.mxu0 0
        %220 = vmatprep.subr.bf16.mxu0 0
        %221 = vmatpush1.bf16.msra.mxu0 0
        %222 = vmatprep.subr.bf16.mxu0 0
        %223 = vmatpush1.bf16.msra.mxu0 0
        %224 = vmatprep.subr.bf16.mxu0 0
        %225 = vmatpush1.bf16.msra.mxu0 0
        %226 = vmatprep.subr.bf16.mxu0 0
        %227 = vmatpush1.bf16.msra.mxu0 %v207
        %228 = vmatprep.subr.bf16.mxu0 0
        %229 = vmatpush1.bf16.msra.mxu0 %v206
        %230 = vmatprep.subr.bf16.mxu0 0
        %231 = vmatpush2.bf16.msra.mxu0 0
        %232 = vmatprep.subr.bf16.mxu0 0
        %233 = vmatpush2.bf16.msra.mxu0 0
        %234 = vmatprep.subr.bf16.mxu0 0
        %235 = vmatpush2.bf16.msra.mxu0 0
        %236 = vmatprep.subr.bf16.mxu0 0
        %237 = vmatpush2.bf16.msra.mxu0 0
        %238 = vmatprep.subr.bf16.mxu0 0
        %239 = vmatpush2.bf16.msra.mxu0 0
        %240 = vmatprep.subr.bf16.mxu0 0
        %241 = vmatpush2.bf16.msra.mxu0 0
        %242 = vmatprep.subr.bf16.mxu0 0
        %243 = vmatpush2.bf16.msra.mxu0 0
        %244 = vmatprep.subr.bf16.mxu0 0
        %245 = vmatpush2.bf16.msra.mxu0 0
        %246 = vmatprep.mubr.bf16.mxu0 0
        %247 = vmatmul.mubr.bf16.gmra.mxu0 %v212
        %v248 = vpop.f32.mrf.mxu0
        %v249 = vadd.f32 0.0, %v248
        %v250 = vpop.f32.mrf.mxu0
        %v251 = vpop.f32.mrf.mxu0
        %v252 = vpop.f32.mrf.mxu0
        %253 = vdwg.mxu0
        %v254 = vpack.c.bf16 %v249, %v249
        %vm255 = vcmask 781312
        %256 = vst.msk [vmem:[%s190] sm:$0xf] %vm255, %v254
        %s257 = sand.u32 %s91, 1
        %s258 = scalar_lea.sflag [#allocation4], %s257
        %s259 = sand.u32 %s91, 1
        %s260 = smul.addr %s259, 4
        %s261 = scalar_lea.vmem [#allocation7], %s260
        // Predicated region
        $region37: #{tpu_custom_call.1} parent=27 // pred_check
          %p262 = pneg %p101
        $region38: #{tpu_custom_call.1} parent=27 // pred_check_branch
          %264 = sbr.rel (%p262) target = $region40
        $region39: #{tpu_custom_call.1} parent=27 // pred_region
          %s266 = ssub.s32 64, 64
          %267 = vsyncadd %s258, %s266
          %s268 = sadd.s32 %s25, %s24
          %s269 = smul.addr %s268, 64
          %s270 = scalar_lea.hbm %s2, %s269
          %s272 = sshll.u32 %s261, 4
          %s273 = int_to_ptr.vmem [resolvable:$true] %s272
          %275 = dma.vmem_to_hbm [thread:$0]  %s273, 64, %s270, %s258
        $region40: #{tpu_custom_call.1} parent=27 // pred_fallthru
          _
      $region28: #{tpu_custom_call.1} parent=5 // pred_fallthru
        _
      %p276 = scmp.le.s32.totalorder 2, %s15
      // Predicated region
      $region41: #{tpu_custom_call.1} parent=5 // pred_check
        %p277 = pneg %p276
      $region42: #{tpu_custom_call.1} parent=5 // pred_check_branch
        %279 = sbr.rel (%p277) target = $region44
      $region43: #{tpu_custom_call.1} parent=5 // pred_region
        %s280 = ssub.s32 %s15, 2
        // Predicated region
        $region45: #{tpu_custom_call.1} parent=43 // pred_check
          %p281 = pneg %p107
        $region46: #{tpu_custom_call.1} parent=43 // pred_check_branch
          %283 = sbr.rel (%p281) target = $region48
        $region47: #{tpu_custom_call.1} parent=43 // pred_region
          %s284 = sand.u32 %s92, 1
          %s285 = scalar_lea.sflag [#allocation4], %s284
          %s286 = sand.u32 %s92, 1
          %s287 = smul.addr %s286, 4
          %s288 = scalar_lea.vmem [#allocation7], %s287
          %289 = dma.done %s285, 64
        $region48: #{tpu_custom_call.1} parent=43 // pred_fallthru
          _
      $region44: #{tpu_custom_call.1} parent=5 // pred_fallthru
        _
    $region6: #{tpu_custom_call.1} parent=1 // loop_footer
      %s19 = sadd.s32 1, %s15
    $region7: #{tpu_custom_call.1} parent=1 // loop_footer_branch
      %14 = sbr.rel target = $region3
    $region8: #{tpu_custom_call.1} parent=1 // loop_exit
      _
    %290 = vsyncpa [#allocation3], 1
    %s291 = scalar_lea.sflag [#allocation3], 1
    %292 = vsyncpa %s291, 1
    %293 = vsyncpa [#allocation6], 1
    %294 = vsyncpa [#allocation4], 1
    %s295 = scalar_lea.sflag [#allocation4], 1
    %296 = vsyncpa %s295, 1

</llo_original>
